<compile_context>
chip_gen: v7x
topology: tpu7x:2x2x1
jax: 0.10.0
libtpu: 0.0.40
codegen_flags: <defaults>
</compile_context>

<pallas_src>
import functools

import jax
import jax.numpy as jnp
import numpy as np
from jax.experimental import pallas as pl
from jax.experimental.pallas import tpu as pltpu


def _gelu(x):
    # tanh-approximate GELU; jnp.tanh lowers to the EUP (its own VLIW slot).
    c = 0.7978845608028654  # sqrt(2/pi)
    return 0.5 * x * (1.0 + jnp.tanh(c * (x + 0.044715 * x * x * x)))


def _largest_divisor_leq(n, cap):
    for d in range(min(cap, n), 0, -1):
        if n % d == 0:
            return d
    return 1


def _default_head_row_blocks():
    # v7x has 2 TensorCores per chip; splitting the head's row axis engages
    # both.  On v5e/v6e (single TC) the duplicated w1 stream is pure extra
    # HBM traffic, so keep 1.
    try:
        kind = jax.devices()[0].device_kind.lower()
    except Exception:
        return 1
    return 2 if "v7" in kind else 1


# ---------------------------------------------------------------------------
# Kernel 1: fused  token-mean -> Mlp(fc1) -> residual -> LayerNorm ->
#           class-token fusion [-> L2-normalize + mean-center], bf16 out.
#           Batch-blocked; fc1 weights stay resident via constant index maps.
# ---------------------------------------------------------------------------
def fused_token_kernel(x_ref, wa_ref, ba_ref, wb_ref, bb_ref, g_ref, be_ref,
                       o_ref, *, normalize):
    x = x_ref[...]                                   # (TB, n, C) f32
    mu = jnp.mean(x, axis=1)                         # (TB, C)   per-element token mean
    h = jnp.dot(mu, wa_ref[...], preferred_element_type=jnp.float32) + ba_ref[...]
    h = _gelu(h)
    y = jnp.dot(h, wb_ref[...], preferred_element_type=jnp.float32) + bb_ref[...]
    z = x + y[:, None, :]                            # residual, broadcast over tokens
    m = jnp.mean(z, axis=-1, keepdims=True)
    v = jnp.mean((z - m) ** 2, axis=-1, keepdims=True)
    z = (z - m) * jax.lax.rsqrt(v + 1e-5) * g_ref[...] + be_ref[...]   # LayerNorm
    # class-token fusion: patches + 2 * cls
    f = z[:, 1:, :] + 2.0 * z[:, 0:1, :]             # (TB, P, C)
    if normalize:                                    # query path: L2-norm + center
        f = f / jnp.maximum(jnp.sqrt(jnp.sum(f * f, axis=-1, keepdims=True)), 1e-12)
        f = f - jnp.mean(f, axis=-1, keepdims=True)
    o_ref[...] = f.astype(o_ref.dtype)


def fused_token_mlp_ln(x, wa, ba, wb, bb, g, be, *, normalize, tb=8):
    B, n, C = x.shape
    P = n - 1
    H1 = wa.shape[1]
    tb = _largest_divisor_leq(B, tb)                 # 4-8 batch elems per step
    return pl.pallas_call(
        functools.partial(fused_token_kernel, normalize=normalize),
        out_shape=jax.ShapeDtypeStruct((B, P, C), jnp.bfloat16),
        grid=(B // tb,),
        in_specs=[
            pl.BlockSpec((tb, n, C), lambda b: (b, 0, 0)),
            pl.BlockSpec((C, H1), lambda b: (0, 0)),   # fc1 weights: resident
            pl.BlockSpec((1, H1), lambda b: (0, 0)),
            pl.BlockSpec((H1, C), lambda b: (0, 0)),
            pl.BlockSpec((1, C), lambda b: (0, 0)),
            pl.BlockSpec((1, C), lambda b: (0, 0)),
            pl.BlockSpec((1, C), lambda b: (0, 0)),
        ],
        out_specs=pl.BlockSpec((tb, P, C), lambda b: (b, 0, 0)),
        compiler_params=pltpu.CompilerParams(dimension_semantics=("parallel",)),
    )(x, wa, ba, wb, bb, g, be)


# ---------------------------------------------------------------------------
# Kernel 2: shot-average + L2-normalize + mean-center support, one way/step.
# ---------------------------------------------------------------------------
def support_prep_kernel(fs_ref, o_ref, *, shot):
    acc = fs_ref[0].astype(jnp.float32)              # (P, C)
    for s in range(1, shot):                         # static tiny loop
        acc = acc + fs_ref[s].astype(jnp.float32)
    f = acc * (1.0 / shot)
    f = f / jnp.maximum(jnp.sqrt(jnp.sum(f * f, axis=-1, keepdims=True)), 1e-12)
    f = f - jnp.mean(f, axis=-1, keepdims=True)
    o_ref[...] = f.astype(o_ref.dtype)


def support_prep(fs4):
    shot, W, P, C = fs4.shape
    return pl.pallas_call(
        functools.partial(support_prep_kernel, shot=shot),
        out_shape=jax.ShapeDtypeStruct((W, P, C), jnp.bfloat16),
        grid=(W,),
        in_specs=[pl.BlockSpec((shot, None, P, C), lambda w: (0, w, 0, 0))],
        out_specs=pl.BlockSpec((None, P, C), lambda w: (w, 0, 0)),
        compiler_params=pltpu.CompilerParams(dimension_semantics=("parallel",)),
    )(fs4)


# ---------------------------------------------------------------------------
# Kernel 3: squared correlations, TQ queries per grid step (amortizes the
#           ~0.35us/step overhead), support tile resident across all steps.
#           Queries are already normalized+centered (kernel 1), so this is a
#           pure bf16 MXU dot + square.
# ---------------------------------------------------------------------------
def corr_kernel(q_ref, s_ref, o_ref, *, tq):
    s = s_ref[...]                                   # (W*P, C) bf16, resident
    for t in range(tq):                              # static query-batch loop
        q = q_ref[t]                                 # (P, C) bf16, pre-normalized
        # m[i, j] = sum_c s[i, c] * q[j, c]  == torch.matmul(shot, query.T) stacked
        m = jax.lax.dot_general(s, q, (((1,), (1,)), ((), ())),
                                preferred_element_type=jnp.float32)  # (W*P, P)
        o_ref[t] = (m * m).astype(o_ref.dtype)


def corr(fq, sn_flat, *, tq=8):
    Q, P, C = fq.shape
    WP = sn_flat.shape[0]
    tq = _largest_divisor_leq(Q, tq)
    # TODO(synk): output last dim stays P (196 in production -> partially masked
    # stores); a fully lane-dense store (or fusing m*m straight into mlp_head's
    # K-tiled accumulator) is a larger restructure left for a future pass.
    return pl.pallas_call(
        functools.partial(corr_kernel, tq=tq),
        out_shape=jax.ShapeDtypeStruct((Q, WP, P), jnp.bfloat16),
        grid=(Q // tq,),
        in_specs=[
            pl.BlockSpec((tq, P, C), lambda qi: (qi, 0, 0)),
            pl.BlockSpec((WP, C), lambda qi: (0, 0)),   # resident across steps
        ],
        out_specs=pl.BlockSpec((tq, WP, P), lambda qi: (qi, 0, 0)),
        compiler_params=pltpu.CompilerParams(dimension_semantics=("parallel",)),
    )(fq, sn_flat)


# ---------------------------------------------------------------------------
# Kernel 4: fc2 Mlp with K-tiled reduction (bf16 weight streaming + f32 acc).
#           Tail masking is gated to the last K tile only; optional row split
#           (grid axis 0, "parallel") for v7x megacore.
# ---------------------------------------------------------------------------
def mlp_head_kernel(x_ref, w1_ref, b1_ref, w2_ref, b2_ref, o_ref, acc_ref, *,
                    k_total, tk, nk):
    k = pl.program_id(1)
    last = nk - 1

    @pl.when(k == 0)
    def _():
        acc_ref[...] = jnp.zeros_like(acc_ref)

    if k_total % tk == 0:
        acc_ref[...] += jnp.dot(x_ref[...], w1_ref[...],
                                preferred_element_type=jnp.float32)
    else:
        @pl.when(k < last)
        def _():
            acc_ref[...] += jnp.dot(x_ref[...], w1_ref[...],
                                    preferred_element_type=jnp.float32)

        @pl.when(k == last)
        def _():
            # Mask BOTH operands' undefined padded tails (0 * NaN would be NaN).
            rem = k_total - last * tk
            x = x_ref[...]
            w = w1_ref[...]
            col = jax.lax.broadcasted_iota(jnp.int32, x.shape, 1)
            row = jax.lax.broadcasted_iota(jnp.int32, w.shape, 0)
            x = jnp.where(col < rem, x, jnp.zeros_like(x))
            w = jnp.where(row < rem, w, jnp.zeros_like(w))
            acc_ref[...] += jnp.dot(x, w, preferred_element_type=jnp.float32)

    @pl.when(k == last)
    def _():
        h = _gelu(acc_ref[...] + b1_ref[...])
        o_ref[...] = (jnp.dot(h, w2_ref[...], preferred_element_type=jnp.float32)
                      + b2_ref[...]).astype(o_ref.dtype)


def mlp_head(x, w1, b1, w2, b2, *, tk=8192, row_blocks=1):
    R, K = x.shape
    H = w1.shape[1]
    tk = min(tk, K)
    if tk < K:
        tk = max(128, (tk // 128) * 128)     # lane-aligned K tiles
    nk = pl.cdiv(K, tk)
    nr = 1
    if row_blocks and row_blocks > 1 and R % row_blocks == 0 \
            and (R // row_blocks) % 8 == 0:
        nr = row_blocks                       # v7x: engage both TensorCores
    tr = R // nr
    return pl.pallas_call(
        functools.partial(mlp_head_kernel, k_total=K, tk=tk, nk=nk),
        out_shape=jax.ShapeDtypeStruct((R, 1), jnp.float32),
        grid=(nr, nk),
        in_specs=[
            pl.BlockSpec((tr, tk), lambda r, k: (r, k)),
            pl.BlockSpec((tk, H), lambda r, k: (k, 0)),
            pl.BlockSpec((1, H), lambda r, k: (0, 0)),
            pl.BlockSpec((H, 1), lambda r, k: (0, 0)),
            pl.BlockSpec((1, 1), lambda r, k: (0, 0)),
        ],
        out_specs=pl.BlockSpec((tr, 1), lambda r, k: (r, 0)),
        scratch_shapes=[pltpu.VMEM((tr, H), jnp.float32)],
        compiler_params=pltpu.CompilerParams(
            dimension_semantics=("parallel", "arbitrary"),
            vmem_limit_bytes=48 * 1024 * 1024),   # tk=8192 peak ~21 MB; v7x-safe
    )(x, w1, b1, w2, b2)


# ---------------------------------------------------------------------------
# CPEALayer forward (Pallas) and a plain-JAX reference
# ---------------------------------------------------------------------------
def prepare_params(p):
    """One-time param prep: cast the big fc2 weight to bf16 (not per call)."""
    q = dict(p)
    q["w1"] = p["w1"].astype(jnp.bfloat16)
    return q


def cpea_forward(feat_query, feat_shot, shot, p, *, head_tk=8192,
                 head_row_blocks=None, ln_tb=8, corr_tq=8):
    Q, n, C = feat_query.shape
    S = feat_shot.shape[0]
    P = n - 1
    way = S // shot

    # fused token-mean -> Mlp(fc1) -> residual -> LayerNorm -> cls fusion;
    # the query path additionally L2-normalizes + centers inside the kernel.
    # (No concatenate: query/shot run as two batch-blocked pallas_calls.)
    fq = fused_token_mlp_ln(feat_query, p["wa"], p["ba"], p["wb"], p["bb"],
                            p["gamma"], p["beta"], normalize=True, tb=ln_tb)
    fs = fused_token_mlp_ln(feat_shot, p["wa"], p["ba"], p["wb"], p["bb"],
                            p["gamma"], p["beta"], normalize=False, tb=ln_tb)

    fs4 = fs.reshape(shot, way, P, C)         # contiguous shot-major: free
    sn = support_prep(fs4)                    # (way, P, C) bf16
    sn_flat = sn.reshape(way * P, C)          # free reshape

    m2 = corr(fq, sn_flat, tq=corr_tq)        # (Q, way*P, P) bf16
    flat = m2.reshape(Q * way, P * P)         # contiguous -> free

    w1 = p["w1"]
    if w1.dtype != jnp.bfloat16:
        # TODO(synk): prefer prepare_params() so this per-call cast never runs.
        w1 = w1.astype(jnp.bfloat16)
    if head_row_blocks is None:
        head_row_blocks = _default_head_row_blocks()
    out = mlp_head(flat, w1, p["b1"], p["w2"], p["b2"],
                   tk=head_tk, row_blocks=head_row_blocks)
    out = out.reshape(Q, way)
    # match the PyTorch return type: list of (1, way) per query
    return [out[i:i + 1, :] for i in range(Q)]


def ref_forward(feat_query, feat_shot, shot, p):
    def mlp1(x):
        h = jax.nn.gelu(x @ p["wa"] + p["ba"], approximate=False)
        return h @ p["wb"] + p["bb"]

    def ln(x):
        m = jnp.mean(x, axis=-1, keepdims=True)
        v = jnp.mean((x - m) ** 2, axis=-1, keepdims=True)
        return (x - m) / jnp.sqrt(v + 1e-5) * p["gamma"] + p["beta"]

    def l2c(x):
        x = x / jnp.maximum(jnp.linalg.norm(x, axis=-1, keepdims=True), 1e-12)
        return x - jnp.mean(x, axis=-1, keepdims=True)

    Q, n, C = feat_query.shape
    fq = ln(mlp1(jnp.mean(feat_query, axis=1, keepdims=True)) + feat_query)
    fs = ln(mlp1(jnp.mean(feat_shot, axis=1, keepdims=True)) + feat_shot)
    fq = fq[:, 1:, :] + 2.0 * fq[:, :1, :]
    fs = fs[:, 1:, :] + 2.0 * fs[:, :1, :]
    way = fs.shape[0] // shot
    fs = l2c(fs.reshape(shot, way, n - 1, C).mean(axis=0))
    fq = l2c(fq)
    results = []
    for idx in range(Q):
        out = jnp.einsum("wpc,jc->wpj", fs, fq[idx])
        out = (out ** 2).reshape(way, -1)
        h = jax.nn.gelu(out @ p["w1"] + p["b1"], approximate=False)
        results.append((h @ p["w2"] + p["b2"]).T)
    return results


if __name__ == "__main__":
    key = jax.random.PRNGKey(0)
    Q, shot, way = 2, 2, 2            # 2 queries, 2-shot, 2-way
    n, C = 26, 32                     # 1 cls + 25 patch tokens, in_dim=32
    H1, H2 = C // 4, 256              # fc1 hidden = in_dim/4, fc2 hidden = 256
    P = n - 1
    ks = jax.random.split(key, 10)
    params = dict(
        wa=jax.random.normal(ks[0], (C, H1), jnp.float32) * 0.1,
        ba=jax.random.normal(ks[1], (1, H1), jnp.float32) * 0.02,
        wb=jax.random.normal(ks[2], (H1, C), jnp.float32) * 0.1,
        bb=jax.random.normal(ks[3], (1, C), jnp.float32) * 0.02,
        gamma=jnp.ones((1, C), jnp.float32),      # nn.LayerNorm default init
        beta=jnp.zeros((1, C), jnp.float32),
        w1=jax.random.normal(ks[4], (P * P, H2), jnp.float32) * 0.02,
        b1=jax.random.normal(ks[5], (1, H2), jnp.float32) * 0.02,
        w2=jax.random.normal(ks[6], (H2, 1), jnp.float32) * 0.05,
        b2=jax.random.normal(ks[7], (1, 1), jnp.float32) * 0.02,
    )
    feat_query = jax.random.normal(ks[8], (Q, n, C), jnp.float32)
    feat_shot = jax.random.normal(ks[9], (shot * way, n, C), jnp.float32)

    run_params = prepare_params(params)       # one-time bf16 cast of w1
    # head_tk=256 so toy K = P*P = 625 splits into 256+256+113 tiles: exercises
    # the K-tiled accumulator AND the pl.when-gated masked tail tile.
    results = cpea_forward(feat_query, feat_shot, shot, run_params, head_tk=256)
    results = [jax.block_until_ready(r) for r in results]

    ref = ref_forward(feat_query, feat_shot, shot, params)
    for got, want in zip(results, ref):
        np.testing.assert_allclose(np.asarray(got), np.asarray(want),
                                   rtol=5e-2, atol=5e-2)
    print("KERNEL_OK")
</pallas_src>

<mosaic_0001>
module attributes {stable_mosaic.version = 11 : i64} {
  func.func @fused_token_kernel(%arg0: i32, %arg1: memref<2x26x32xf32, #tpu.memory_space<vmem>>, %arg2: memref<32x8xf32, #tpu.memory_space<vmem>>, %arg3: memref<1x8xf32, #tpu.memory_space<vmem>>, %arg4: memref<8x32xf32, #tpu.memory_space<vmem>>, %arg5: memref<1x32xf32, #tpu.memory_space<vmem>>, %arg6: memref<1x32xf32, #tpu.memory_space<vmem>>, %arg7: memref<1x32xf32, #tpu.memory_space<vmem>>, %arg8: memref<2x25x32xbf16, #tpu.memory_space<vmem>>) attributes {dimension_semantics = [#tpu.dimension_semantics<parallel>], iteration_bounds = array<i64: 1>, scalar_prefetch = 0 : i64, scratch_operands = 0 : i64, tpu.core_type = #tpu.core_type<tc>, window_params = [{transform_indices = @transform_0, window_bounds = array<i64: 2, 26, 32>}, {pipeline_mode = #tpu.pipeline_mode<synchronous>, transform_indices = @transform_1, window_bounds = array<i64: 32, 8>}, {pipeline_mode = #tpu.pipeline_mode<synchronous>, transform_indices = @transform_2, window_bounds = array<i64: 1, 8>}, {pipeline_mode = #tpu.pipeline_mode<synchronous>, transform_indices = @transform_3, window_bounds = array<i64: 8, 32>}, {pipeline_mode = #tpu.pipeline_mode<synchronous>, transform_indices = @transform_4, window_bounds = array<i64: 1, 32>}, {pipeline_mode = #tpu.pipeline_mode<synchronous>, transform_indices = @transform_5, window_bounds = array<i64: 1, 32>}, {pipeline_mode = #tpu.pipeline_mode<synchronous>, transform_indices = @transform_6, window_bounds = array<i64: 1, 32>}, {transform_indices = @transform_7, window_bounds = array<i64: 2, 25, 32>}]} {
    %c0 = arith.constant 0 : index
    %c0_0 = arith.constant 0 : index
    %c0_1 = arith.constant 0 : index
    %0 = vector.load %arg1[%c0, %c0_0, %c0_1] : memref<2x26x32xf32, #tpu.memory_space<vmem>>, vector<2x26x32xf32>
    %cst = arith.constant dense<0.000000e+00> : vector<2x32xf32>
    %1 = vector.multi_reduction <add>, %0, %cst [1] : vector<2x26x32xf32> to vector<2x32xf32>
    %cst_2 = arith.constant 2.600000e+01 : f32
    %2 = vector.broadcast %cst_2 : f32 to vector<2x32xf32>
    %3 = arith.divf %1, %2 : vector<2x32xf32>
    %c0_3 = arith.constant 0 : index
    %c0_4 = arith.constant 0 : index
    %4 = vector.load %arg2[%c0_3, %c0_4] : memref<32x8xf32, #tpu.memory_space<vmem>>, vector<32x8xf32>
    %cst_5 = arith.constant dense<0.000000e+00> : vector<2x8xf32>
    %5 = tpu.matmul %3, %4, %cst_5 {dimension_numbers = #tpu.dot_dimension_numbers<[1], [0], [0], [1], [0, 0, 1, 1], [], []>} : vector<2x32xf32>, vector<32x8xf32>, vector<2x8xf32> -> vector<2x8xf32>
    %c0_6 = arith.constant 0 : index
    %c0_7 = arith.constant 0 : index
    %6 = vector.load %arg3[%c0_6, %c0_7] : memref<1x8xf32, #tpu.memory_space<vmem>>, vector<1x8xf32>
    %7 = vector.broadcast %6 : vector<1x8xf32> to vector<2x8xf32>
    %8 = arith.addf %5, %7 : vector<2x8xf32>
    %cst_8 = arith.constant 5.000000e-01 : f32
    %9 = vector.broadcast %cst_8 : f32 to vector<2x8xf32>
    %10 = arith.mulf %9, %8 : vector<2x8xf32>
    %cst_9 = arith.constant 4.471500e-02 : f32
    %11 = vector.broadcast %cst_9 : f32 to vector<2x8xf32>
    %12 = arith.mulf %11, %8 : vector<2x8xf32>
    %13 = arith.mulf %12, %8 : vector<2x8xf32>
    %14 = arith.mulf %13, %8 : vector<2x8xf32>
    %15 = arith.addf %8, %14 : vector<2x8xf32>
    %cst_10 = arith.constant 0.797884583 : f32
    %16 = vector.broadcast %cst_10 : f32 to vector<2x8xf32>
    %17 = arith.mulf %16, %15 : vector<2x8xf32>
    %18 = math.tanh %17 : vector<2x8xf32>
    %cst_11 = arith.constant 1.000000e+00 : f32
    %19 = vector.broadcast %cst_11 : f32 to vector<2x8xf32>
    %20 = arith.addf %19, %18 : vector<2x8xf32>
    %21 = arith.mulf %10, %20 : vector<2x8xf32>
    %c0_12 = arith.constant 0 : index
    %c0_13 = arith.constant 0 : index
    %22 = vector.load %arg4[%c0_12, %c0_13] : memref<8x32xf32, #tpu.memory_space<vmem>>, vector<8x32xf32>
    %cst_14 = arith.constant dense<0.000000e+00> : vector<2x32xf32>
    %23 = tpu.matmul %21, %22, %cst_14 {dimension_numbers = #tpu.dot_dimension_numbers<[1], [0], [0], [1], [0, 0, 1, 1], [], []>} : vector<2x8xf32>, vector<8x32xf32>, vector<2x32xf32> -> vector<2x32xf32>
    %c0_15 = arith.constant 0 : index
    %c0_16 = arith.constant 0 : index
    %24 = vector.load %arg5[%c0_15, %c0_16] : memref<1x32xf32, #tpu.memory_space<vmem>>, vector<1x32xf32>
    %25 = vector.broadcast %24 : vector<1x32xf32> to vector<2x32xf32>
    %26 = arith.addf %23, %25 : vector<2x32xf32>
    %27 = vector.shape_cast %26 : vector<2x32xf32> to vector<2x1x32xf32>
    %28 = vector.broadcast %27 : vector<2x1x32xf32> to vector<2x26x32xf32>
    %29 = arith.addf %0, %28 : vector<2x26x32xf32>
    %cst_17 = arith.constant dense<0.000000e+00> : vector<2x26xf32>
    %30 = vector.multi_reduction <add>, %29, %cst_17 [2] : vector<2x26x32xf32> to vector<2x26xf32>
    %31 = vector.shape_cast %30 : vector<2x26xf32> to vector<2x26x1xf32>
    %cst_18 = arith.constant 3.200000e+01 : f32
    %32 = vector.broadcast %cst_18 : f32 to vector<2x26x1xf32>
    %33 = arith.divf %31, %32 : vector<2x26x1xf32>
    %34 = vector.broadcast %33 : vector<2x26x1xf32> to vector<2x26x32xf32>
    %35 = arith.subf %29, %34 : vector<2x26x32xf32>
    %36 = arith.mulf %35, %35 : vector<2x26x32xf32>
    %cst_19 = arith.constant dense<0.000000e+00> : vector<2x26xf32>
    %37 = vector.multi_reduction <add>, %36, %cst_19 [2] : vector<2x26x32xf32> to vector<2x26xf32>
    %38 = vector.shape_cast %37 : vector<2x26xf32> to vector<2x26x1xf32>
    %cst_20 = arith.constant 3.200000e+01 : f32
    %39 = vector.broadcast %cst_20 : f32 to vector<2x26x1xf32>
    %40 = arith.divf %38, %39 : vector<2x26x1xf32>
    %41 = vector.broadcast %33 : vector<2x26x1xf32> to vector<2x26x32xf32>
    %42 = arith.subf %29, %41 : vector<2x26x32xf32>
    %cst_21 = arith.constant 9.99999974E-6 : f32
    %43 = vector.broadcast %cst_21 : f32 to vector<2x26x1xf32>
    %44 = arith.addf %40, %43 : vector<2x26x1xf32>
    %45 = math.rsqrt %44 : vector<2x26x1xf32>
    %46 = vector.broadcast %45 : vector<2x26x1xf32> to vector<2x26x32xf32>
    %47 = arith.mulf %42, %46 : vector<2x26x32xf32>
    %c0_22 = arith.constant 0 : index
    %c0_23 = arith.constant 0 : index
    %48 = vector.load %arg6[%c0_22, %c0_23] : memref<1x32xf32, #tpu.memory_space<vmem>>, vector<1x32xf32>
    %49 = vector.shape_cast %48 : vector<1x32xf32> to vector<1x1x32xf32>
    %50 = vector.broadcast %49 : vector<1x1x32xf32> to vector<2x26x32xf32>
    %51 = arith.mulf %47, %50 : vector<2x26x32xf32>
    %c0_24 = arith.constant 0 : index
    %c0_25 = arith.constant 0 : index
    %52 = vector.load %arg7[%c0_24, %c0_25] : memref<1x32xf32, #tpu.memory_space<vmem>>, vector<1x32xf32>
    %53 = vector.shape_cast %52 : vector<1x32xf32> to vector<1x1x32xf32>
    %54 = vector.broadcast %53 : vector<1x1x32xf32> to vector<2x26x32xf32>
    %55 = arith.addf %51, %54 : vector<2x26x32xf32>
    %56 = vector.extract_strided_slice %55 {offsets = [0, 1, 0], sizes = [2, 25, 32], strides = [1, 1, 1]} : vector<2x26x32xf32> to vector<2x25x32xf32>
    %57 = vector.extract_strided_slice %55 {offsets = [0, 0, 0], sizes = [2, 1, 32], strides = [1, 1, 1]} : vector<2x26x32xf32> to vector<2x1x32xf32>
    %cst_26 = arith.constant 2.000000e+00 : f32
    %58 = vector.broadcast %cst_26 : f32 to vector<2x1x32xf32>
    %59 = arith.mulf %58, %57 : vector<2x1x32xf32>
    %60 = vector.broadcast %59 : vector<2x1x32xf32> to vector<2x25x32xf32>
    %61 = arith.addf %56, %60 : vector<2x25x32xf32>
    %62 = arith.mulf %61, %61 : vector<2x25x32xf32>
    %cst_27 = arith.constant dense<0.000000e+00> : vector<2x25xf32>
    %63 = vector.multi_reduction <add>, %62, %cst_27 [2] : vector<2x25x32xf32> to vector<2x25xf32>
    %64 = vector.shape_cast %63 : vector<2x25xf32> to vector<2x25x1xf32>
    %65 = math.sqrt %64 : vector<2x25x1xf32>
    %cst_28 = arith.constant 9.99999996E-13 : f32
    %66 = vector.broadcast %cst_28 : f32 to vector<2x25x1xf32>
    %67 = arith.maximumf %65, %66 : vector<2x25x1xf32>
    %68 = vector.broadcast %67 : vector<2x25x1xf32> to vector<2x25x32xf32>
    %69 = arith.divf %61, %68 : vector<2x25x32xf32>
    %cst_29 = arith.constant dense<0.000000e+00> : vector<2x25xf32>
    %70 = vector.multi_reduction <add>, %69, %cst_29 [2] : vector<2x25x32xf32> to vector<2x25xf32>
    %71 = vector.shape_cast %70 : vector<2x25xf32> to vector<2x25x1xf32>
    %cst_30 = arith.constant 3.200000e+01 : f32
    %72 = vector.broadcast %cst_30 : f32 to vector<2x25x1xf32>
    %73 = arith.divf %71, %72 : vector<2x25x1xf32>
    %74 = vector.broadcast %73 : vector<2x25x1xf32> to vector<2x25x32xf32>
    %75 = arith.subf %69, %74 : vector<2x25x32xf32>
    %76 = arith.truncf %75 : vector<2x25x32xf32> to vector<2x25x32xbf16>
    %c0_31 = arith.constant 0 : index
    %c0_32 = arith.constant 0 : index
    %c0_33 = arith.constant 0 : index
    %77 = vector.load %arg8[%c0_31, %c0_32, %c0_33] : memref<2x25x32xbf16, #tpu.memory_space<vmem>>, vector<2x25x32xbf16>
    tpu.vector_store %arg8[%c0_31, %c0_32, %c0_33], %76 {strides = array<i32>} : memref<2x25x32xbf16, #tpu.memory_space<vmem>>, vector<2x25x32xbf16>,
    return
  }
  func.func @transform_0(%arg0: i32) -> (i32, i32, i32) {
    %c0_i32 = arith.constant 0 : i32
    %c0_i32_0 = arith.constant 0 : i32
    %c0_i32_1 = arith.constant 0 : i32
    return %arg0, %c0_i32, %c0_i32_0 : i32, i32, i32
  }
  func.func @transform_1(%arg0: i32) -> (i32, i32) {
    %c0_i32 = arith.constant 0 : i32
    %c0_i32_0 = arith.constant 0 : i32
    %c0_i32_1 = arith.constant 0 : i32
    return %c0_i32, %c0_i32_0 : i32, i32
  }
  func.func @transform_2(%arg0: i32) -> (i32, i32) {
    %c0_i32 = arith.constant 0 : i32
    %c0_i32_0 = arith.constant 0 : i32
    %c0_i32_1 = arith.constant 0 : i32
    return %c0_i32, %c0_i32_0 : i32, i32
  }
  func.func @transform_3(%arg0: i32) -> (i32, i32) {
    %c0_i32 = arith.constant 0 : i32
    %c0_i32_0 = arith.constant 0 : i32
    %c0_i32_1 = arith.constant 0 : i32
    return %c0_i32, %c0_i32_0 : i32, i32
  }
  func.func @transform_4(%arg0: i32) -> (i32, i32) {
    %c0_i32 = arith.constant 0 : i32
    %c0_i32_0 = arith.constant 0 : i32
    %c0_i32_1 = arith.constant 0 : i32
    return %c0_i32, %c0_i32_0 : i32, i32
  }
  func.func @transform_5(%arg0: i32) -> (i32, i32) {
    %c0_i32 = arith.constant 0 : i32
    %c0_i32_0 = arith.constant 0 : i32
    %c0_i32_1 = arith.constant 0 : i32
    return %c0_i32, %c0_i32_0 : i32, i32
  }
  func.func @transform_6(%arg0: i32) -> (i32, i32) {
    %c0_i32 = arith.constant 0 : i32
    %c0_i32_0 = arith.constant 0 : i32
    %c0_i32_1 = arith.constant 0 : i32
    return %c0_i32, %c0_i32_0 : i32, i32
  }
  func.func @transform_7(%arg0: i32) -> (i32, i32, i32) {
    %c0_i32 = arith.constant 0 : i32
    %c0_i32_0 = arith.constant 0 : i32
    %c0_i32_1 = arith.constant 0 : i32
    return %arg0, %c0_i32, %c0_i32_0 : i32, i32, i32
  }
}

</mosaic_0001>

<llo_original>
// kernel: tpu_custom_call.1
$region0: #{tpu_custom_call.1}
  #allocation0 [shape = 'u32[]', space=smem, size = 0x4, offset = 0x4, fixed_abs, tag = 'smem constant byte address 0x4 - core index']
  #allocation1 [shape = 'u32[144,128]{1,0:T(1,128)}', space=vmem, size = 0x12000, scoped, tag = 'internal scratch']
  %s0 = inlined_call_operand.vmem [shape: f32[2,26,32], index: 0, kind: input, shape index: {}]
  %s1 = inlined_call_operand.vmem [shape: f32[32,8], index: 1, kind: input, shape index: {}]
  %s2 = inlined_call_operand.vmem [shape: f32[1,8], index: 2, kind: input, shape index: {}]
  %s3 = inlined_call_operand.vmem [shape: f32[8,32], index: 3, kind: input, shape index: {}]
  %s4 = inlined_call_operand.vmem [shape: f32[1,32], index: 4, kind: input, shape index: {}]
  %s5 = inlined_call_operand.vmem [shape: f32[1,32], index: 5, kind: input, shape index: {}]
  %s6 = inlined_call_operand.vmem [shape: f32[1,32], index: 6, kind: input, shape index: {}]
  %s7 = inlined_call_operand.vmem [shape: bf16[2,25,32], index: 7, kind: output, shape index: {}]
  %s8 = sld [smem:[#allocation0]]
  $region38: #{tpu_custom_call.1} parent=0
    _
  %s10 = ssub.s32 1, %s8
  %s11 = scalar_select 0, %s10, %s8
  // Predicated region
  $region2: #{tpu_custom_call.1} parent=0 // pred_check
    _
  $region3: #{tpu_custom_call.1} parent=0 // pred_check_branch
    %13 = sbr.rel (0) target = $region5
  $region4: #{tpu_custom_call.1} parent=0 // pred_region
    _
  $region5: #{tpu_custom_call.1} parent=0 // pred_fallthru
    _
  // Predicated region
  $region6: #{tpu_custom_call.1} parent=0 // pred_check
    _
  $region7: #{tpu_custom_call.1} parent=0 // pred_check_branch
    %15 = sbr.rel (0) target = $region9
  $region8: #{tpu_custom_call.1} parent=0 // pred_region
    _
  $region9: #{tpu_custom_call.1} parent=0 // pred_fallthru
    _
  // Predicated region
  $region10: #{tpu_custom_call.1} parent=0 // pred_check
    _
  $region11: #{tpu_custom_call.1} parent=0 // pred_check_branch
    %17 = sbr.rel (0) target = $region13
  $region12: #{tpu_custom_call.1} parent=0 // pred_region
    _
  $region13: #{tpu_custom_call.1} parent=0 // pred_fallthru
    _
  // Predicated region
  $region14: #{tpu_custom_call.1} parent=0 // pred_check
    _
  $region15: #{tpu_custom_call.1} parent=0 // pred_check_branch
    %19 = sbr.rel (0) target = $region17
  $region16: #{tpu_custom_call.1} parent=0 // pred_region
    _
  $region17: #{tpu_custom_call.1} parent=0 // pred_fallthru
    _
  // Predicated region
  $region18: #{tpu_custom_call.1} parent=0 // pred_check
    _
  $region19: #{tpu_custom_call.1} parent=0 // pred_check_branch
    %21 = sbr.rel (0) target = $region21
  $region20: #{tpu_custom_call.1} parent=0 // pred_region
    _
  $region21: #{tpu_custom_call.1} parent=0 // pred_fallthru
    _
  // Predicated region
  $region22: #{tpu_custom_call.1} parent=0 // pred_check
    _
  $region23: #{tpu_custom_call.1} parent=0 // pred_check_branch
    %23 = sbr.rel (0) target = $region25
  $region24: #{tpu_custom_call.1} parent=0 // pred_region
    _
  $region25: #{tpu_custom_call.1} parent=0 // pred_fallthru
    _
  // Predicated region
  $region26: #{tpu_custom_call.1} parent=0 // pred_check
    _
  $region27: #{tpu_custom_call.1} parent=0 // pred_check_branch
    %25 = sbr.rel (0) target = $region29
  $region28: #{tpu_custom_call.1} parent=0 // pred_region
    _
  $region29: #{tpu_custom_call.1} parent=0 // pred_fallthru
    _
  %v26 = vld [vmem:[%s0] sm:$0xff]
  %v27 = vld [vmem:[%s0 + $0x8] sm:$0xff]
  %v28 = vld [vmem:[%s0 + $0x10] sm:$0xff]
  %v29 = vld [vmem:[%s0 + $0x18] sm:$0x3]
  %v30 = vld [vmem:[%s0 + $0x20] sm:$0xff]
  %v31 = vld [vmem:[%s0 + $0x28] sm:$0xff]
  %v32 = vld [vmem:[%s0 + $0x30] sm:$0xff]
  %v33 = vld [vmem:[%s0 + $0x38] sm:$0x3]
  %vm34 = vcmask 261120
  %v35 = vsel %vm34, %v26, 0.0
  %v36 = vsel %vm34, %v27, 0.0
  %v37 = vadd.f32 %v35, %v36
  %v38 = vsel %vm34, %v28, 0.0
  %v39 = vadd.f32 %v37, %v38
  %vm40 = vcmask 254976
  %v41 = vsel %vm40, %v29, 0.0
  %v42 = vadd.f32 %v39, %v41
  %v43 = vrot.slane %v42, 4
  %v44 = vadd.f32 %v42, %v43
  %v45 = vrot.slane %v44, 2
  %v46 = vadd.f32 %v44, %v45
  %v47 = vrot.slane %v46, 1
  %v48 = vadd.f32 %v46, %v47
  %v49 = vsel %vm34, %v30, 0.0
  %v50 = vsel %vm34, %v31, 0.0
  %v51 = vadd.f32 %v49, %v50
  %v52 = vsel %vm34, %v32, 0.0
  %v53 = vadd.f32 %v51, %v52
  %v54 = vsel %vm40, %v33, 0.0
  %v55 = vadd.f32 %v53, %v54
  %v56 = vrot.slane %v55, 4
  %v57 = vadd.f32 %v55, %v56
  %v58 = vrot.slane %v57, 2
  %v59 = vadd.f32 %v57, %v58
  %v60 = vrot.slane %v59, 1
  %v61 = vadd.f32 %v59, %v60
  %v62 = vrcp.pop 26.0
  %v63 = vmul.f32 %v48, %v62
  %v64 = vmul.f32 %v61, %v62
  %v65 = vld [vmem:[%s1] sm:$0xff]
  %v66 = vld [vmem:[%s1 + $0x8] sm:$0xff]
  %v67 = vld [vmem:[%s1 + $0x10] sm:$0xff]
  %v68 = vld [vmem:[%s1 + $0x18] sm:$0xff]
  %v69 = vld [vmem:[%s2] sm:$0x1]
  %v71 = vlaneseq
  %v72 = vshrl.u32 %v71, 7
  %v73 = vsub.s32 0, %v72
  %v74 = vrot.slane %v69, %v73
  %vm78 = vcmask 1041409
  %v79 = vsel %vm78, %v64, %v63
  %v80 = vsel %vm34, %v79, 0
  %82 = vmatprep.subr.mxu0 0.0
  %83 = vmatpush1.msra.mxu0 %v65
  %84 = vmatprep.subr.mxu0 0.0
  %85 = vmatpush1.msra.mxu0 %v66
  %86 = vmatprep.subr.mxu0 0.0
  %87 = vmatpush1.msra.mxu0 %v67
  %88 = vmatprep.subr.mxu0 0.0
  %89 = vmatpush1.msra.mxu0 %v68
  %90 = vmatprep.subr.mxu0 0.0
  %91 = vmatpush1.msra.mxu0 0.0
  %92 = vmatprep.subr.mxu0 0.0
  %93 = vmatpush1.msra.mxu0 0.0
  %94 = vmatprep.subr.mxu0 0.0
  %95 = vmatpush1.msra.mxu0 0.0
  %96 = vmatprep.subr.mxu0 0.0
  %97 = vmatpush1.msra.mxu0 0.0
  %98 = vmatprep.subr.mxu0 0.0
  %99 = vmatpush1.msra.mxu0 0.0
  %100 = vmatprep.subr.mxu0 0.0
  %101 = vmatpush1.msra.mxu0 0.0
  %102 = vmatprep.subr.mxu0 0.0
  %103 = vmatpush1.msra.mxu0 0.0
  %104 = vmatprep.subr.mxu0 0.0
  %105 = vmatpush1.msra.mxu0 0.0
  %106 = vmatprep.subr.mxu0 0.0
  %107 = vmatpush1.msra.mxu0 0.0
  %108 = vmatprep.subr.mxu0 0.0
  %109 = vmatpush1.msra.mxu0 0.0
  %110 = vmatprep.subr.mxu0 0.0
  %111 = vmatpush1.msra.mxu0 0.0
  %112 = vmatprep.subr.mxu0 0.0
  %113 = vmatpush1.msra.mxu0 0.0
  %114 = vmatprep.subr.mxu0 0.0
  %115 = vmatpush1.msra.mxu0 0.0
  %116 = vmatprep.subr.mxu0 0.0
  %117 = vmatpush1.msra.mxu0 0.0
  %118 = vmatprep.subr.mxu0 0.0
  %119 = vmatpush1.msra.mxu0 0.0
  %120 = vmatprep.subr.mxu0 0.0
  %121 = vmatpush1.msra.mxu0 0.0
  %122 = vmatprep.subr.mxu0 0.0
  %123 = vmatpush1.msra.mxu0 0.0
  %124 = vmatprep.subr.mxu0 0.0
  %125 = vmatpush1.msra.mxu0 0.0
  %126 = vmatprep.subr.mxu0 0.0
  %127 = vmatpush1.msra.mxu0 0.0
  %128 = vmatprep.subr.mxu0 0.0
  %129 = vmatpush1.msra.mxu0 0.0
  %130 = vmatprep.subr.mxu0 0.0
  %131 = vmatpush1.msra.mxu0 0.0
  %132 = vmatprep.subr.mxu0 0.0
  %133 = vmatpush1.msra.mxu0 0.0
  %134 = vmatprep.subr.mxu0 0.0
  %135 = vmatpush1.msra.mxu0 0.0
  %136 = vmatprep.subr.mxu0 0.0
  %137 = vmatpush1.msra.mxu0 0.0
  %138 = vmatprep.subr.mxu0 0.0
  %139 = vmatpush1.msra.mxu0 0.0
  %140 = vmatprep.subr.mxu0 0.0
  %141 = vmatpush1.msra.mxu0 0.0
  %142 = vmatprep.subr.mxu0 0.0
  %143 = vmatpush1.msra.mxu0 0.0
  %144 = vmatprep.subr.mxu0 0.0
  %145 = vmatpush1.msra.mxu0 0.0
  %146 = vmatprep.mubr.f32.mxu0 0.0
  %147 = vmatmul.mubr.f32.gmra.mrb[0].mxu0 %v80
  %v148 = vpop.f32.mrb[0].mxu0
  %v149 = vadd.f32 %v74, %v148
  %v150 = vpop.f32.mrb[0].mxu0
  %151 = vdwg.mxu0
  %v152 = vmul.f32 %v149, 0.5
  %v153 = vmul.f32 %v149, 0.044715
  %v154 = vmul.f32 %v153, %v149
  %v155 = vmul.f32 %v154, %v149
  %v156 = vadd.f32 %v149, %v155
  %v157 = vmul.f32 %v156, 0.7978846
  %v158 = vtanh.pop %v157
  %v159 = vadd.f32 %v158, 1.0
  %v160 = vmul.f32 %v152, %v159
  %v161 = vld [vmem:[%s3] sm:$0xff]
  %v162 = vld [vmem:[%s4] sm:$0x1]
  %v164 = vlaneseq
  %v165 = vshrl.u32 %v164, 7
  %v166 = vsub.s32 0, %v165
  %v167 = vrot.slane %v162, %v166
  %vm169 = vcmask 64512
  %v171 = vsel %vm169, %v160, 0
  %173 = vmatprep.subr.mxu0 0.0
  %174 = vmatpush1.msra.mxu0 %v161
  %175 = vmatprep.subr.mxu0 0.0
  %176 = vmatpush1.msra.mxu0 0.0
  %177 = vmatprep.subr.mxu0 0.0
  %178 = vmatpush1.msra.mxu0 0.0
  %179 = vmatprep.subr.mxu0 0.0
  %180 = vmatpush1.msra.mxu0 0.0
  %181 = vmatprep.subr.mxu0 0.0
  %182 = vmatpush1.msra.mxu0 0.0
  %183 = vmatprep.subr.mxu0 0.0
  %184 = vmatpush1.msra.mxu0 0.0
  %185 = vmatprep.subr.mxu0 0.0
  %186 = vmatpush1.msra.mxu0 0.0
  %187 = vmatprep.subr.mxu0 0.0
  %188 = vmatpush1.msra.mxu0 0.0
  %189 = vmatprep.subr.mxu0 0.0
  %190 = vmatpush1.msra.mxu0 0.0
  %191 = vmatprep.subr.mxu0 0.0
  %192 = vmatpush1.msra.mxu0 0.0
  %193 = vmatprep.subr.mxu0 0.0
  %194 = vmatpush1.msra.mxu0 0.0
  %195 = vmatprep.subr.mxu0 0.0
  %196 = vmatpush1.msra.mxu0 0.0
  %197 = vmatprep.subr.mxu0 0.0
  %198 = vmatpush1.msra.mxu0 0.0
  %199 = vmatprep.subr.mxu0 0.0
  %200 = vmatpush1.msra.mxu0 0.0
  %201 = vmatprep.subr.mxu0 0.0
  %202 = vmatpush1.msra.mxu0 0.0
  %203 = vmatprep.subr.mxu0 0.0
  %204 = vmatpush1.msra.mxu0 0.0
  %205 = vmatprep.subr.mxu0 0.0
  %206 = vmatpush1.msra.mxu0 0.0
  %207 = vmatprep.subr.mxu0 0.0
  %208 = vmatpush1.msra.mxu0 0.0
  %209 = vmatprep.subr.mxu0 0.0
  %210 = vmatpush1.msra.mxu0 0.0
  %211 = vmatprep.subr.mxu0 0.0
  %212 = vmatpush1.msra.mxu0 0.0
  %213 = vmatprep.subr.mxu0 0.0
  %214 = vmatpush1.msra.mxu0 0.0
  %215 = vmatprep.subr.mxu0 0.0
  %216 = vmatpush1.msra.mxu0 0.0
  %217 = vmatprep.subr.mxu0 0.0
  %218 = vmatpush1.msra.mxu0 0.0
  %219 = vmatprep.subr.mxu0 0.0
  %220 = vmatpush1.msra.mxu0 0.0
  %221 = vmatprep.subr.mxu0 0.0
  %222 = vmatpush1.msra.mxu0 0.0
  %223 = vmatprep.subr.mxu0 0.0
  %224 = vmatpush1.msra.mxu0 0.0
  %225 = vmatprep.subr.mxu0 0.0
  %226 = vmatpush1.msra.mxu0 0.0
  %227 = vmatprep.subr.mxu0 0.0
  %228 = vmatpush1.msra.mxu0 0.0
  %229 = vmatprep.subr.mxu0 0.0
  %230 = vmatpush1.msra.mxu0 0.0
  %231 = vmatprep.subr.mxu0 0.0
  %232 = vmatpush1.msra.mxu0 0.0
  %233 = vmatprep.subr.mxu0 0.0
  %234 = vmatpush1.msra.mxu0 0.0
  %235 = vmatprep.subr.mxu0 0.0
  %236 = vmatpush1.msra.mxu0 0.0
  %237 = vmatprep.mubr.f32.mxu0 0.0
  %238 = vmatmul.mubr.f32.gmra.mrb[0].mxu0 %v171
  %v239 = vpop.f32.mrb[0].mxu0
  %v240 = vadd.f32 %v167, %v239
  %v241 = vpop.f32.mrb[0].mxu0
  %242 = vdwg.mxu0
  %v245 = vunpack.c.l.s4 1966171168
  %v246 = vunpack.c.0.s8 %v245
  %v247 = vlaneseq
  %v248 = vshrl.u32 %v247, 7
  %v249 = vsub.s32 %v246, %v248
  %v250 = vrot.slane %v240, %v249
  %v251 = vcombine.high %v250, %v250
  %v253 = vunpack.c.l.s4 1966171168
  %v254 = vunpack.c.0.s8 %v253
  %v255 = vlaneseq
  %v256 = vshrl.u32 %v255, 7
  %v257 = vsub.s32 %v254, %v256
  %v258 = vrot.slane %v250, %v257
  %v260 = vunpack.c.l.s4 1966171168
  %v261 = vunpack.c.0.s8 %v260
  %v262 = vlaneseq
  %v263 = vshrl.u32 %v262, 7
  %v264 = vsub.s32 %v261, %v263
  %v265 = vrot.slane %v251, %v264
  %v266 = vlaneseq
  %v267 = vshrl.u32 %v266, 7
  %v268 = vsub.s32 0, %v267
  %v269 = vrot.slane %v258, %v268
  %v270 = vlaneseq
  %v271 = vshrl.u32 %v270, 7
  %v272 = vsub.s32 0, %v271
  %v273 = vrot.slane %v265, %v272
  %v276 = vadd.f32 %v26, %v269
  %v277 = vadd.f32 %v27, %v269
  %v278 = vadd.f32 %v28, %v269
  %v279 = vadd.f32 %v29, %v269
  %v280 = vadd.f32 %v30, %v273
  %v281 = vadd.f32 %v31, %v273
  %v282 = vadd.f32 %v32, %v273
  %v283 = vadd.f32 %v33, %v273
  %v284 = vsel %vm34, %v276, 0.0
  %285 = vadd.xlane.f32.xlu0 %v284
  %v286 = vpop.xlane.xlu0 %285
  %v287 = vsel %vm34, %v277, 0.0
  %288 = vadd.xlane.f32.xlu0 %v287
  %v289 = vpop.xlane.xlu0 %288
  %v290 = vsel %vm34, %v278, 0.0
  %291 = vadd.xlane.f32.xlu0 %v290
  %v292 = vpop.xlane.xlu0 %291
  %v293 = vsel %vm40, %v279, 0.0
  %294 = vadd.xlane.f32.xlu0 %v293
  %v295 = vpop.xlane.xlu0 %294
  %v296 = vsel %vm34, %v280, 0.0
  %297 = vadd.xlane.f32.xlu0 %v296
  %v298 = vpop.xlane.xlu0 %297
  %v299 = vsel %vm34, %v281, 0.0
  %300 = vadd.xlane.f32.xlu0 %v299
  %v301 = vpop.xlane.xlu0 %300
  %v302 = vsel %vm34, %v282, 0.0
  %303 = vadd.xlane.f32.xlu0 %v302
  %v304 = vpop.xlane.xlu0 %303
  %v305 = vsel %vm40, %v283, 0.0
  %306 = vadd.xlane.f32.xlu0 %v305
  %v307 = vpop.xlane.xlu0 %306
  %v308 = vrcp.pop 32.0
  %v309 = vmul.f32 %v286, %v308
  %v310 = vmul.f32 %v289, %v308
  %v311 = vmul.f32 %v292, %v308
  %v312 = vmul.f32 %v295, %v308
  %v313 = vmul.f32 %v298, %v308
  %v314 = vmul.f32 %v301, %v308
  %v315 = vmul.f32 %v304, %v308
  %v316 = vmul.f32 %v307, %v308
  %v317 = vsub.f32 %v276, %v309
  %v318 = vsub.f32 %v277, %v310
  %v319 = vsub.f32 %v278, %v311
  %v320 = vsub.f32 %v279, %v312
  %v321 = vsub.f32 %v280, %v313
  %v322 = vsub.f32 %v281, %v314
  %v323 = vsub.f32 %v282, %v315
  %v324 = vsub.f32 %v283, %v316
  %v325 = vmul.f32 %v317, %v317
  %v326 = vmul.f32 %v318, %v318
  %v327 = vmul.f32 %v319, %v319
  %v328 = vmul.f32 %v320, %v320
  %v329 = vmul.f32 %v321, %v321
  %v330 = vmul.f32 %v322, %v322
  %v331 = vmul.f32 %v323, %v323
  %v332 = vmul.f32 %v324, %v324
  %v333 = vsel %vm34, %v325, 0.0
  %334 = vadd.xlane.f32.xlu0 %v333
  %v335 = vpop.xlane.xlu0 %334
  %v336 = vsel %vm34, %v326, 0.0
  %337 = vadd.xlane.f32.xlu0 %v336
  %v338 = vpop.xlane.xlu0 %337
  %v339 = vsel %vm34, %v327, 0.0
  %340 = vadd.xlane.f32.xlu0 %v339
  %v341 = vpop.xlane.xlu0 %340
  %v342 = vsel %vm40, %v328, 0.0
  %343 = vadd.xlane.f32.xlu0 %v342
  %v344 = vpop.xlane.xlu0 %343
  %v345 = vsel %vm34, %v329, 0.0
  %346 = vadd.xlane.f32.xlu0 %v345
  %v347 = vpop.xlane.xlu0 %346
  %v348 = vsel %vm34, %v330, 0.0
  %349 = vadd.xlane.f32.xlu0 %v348
  %v350 = vpop.xlane.xlu0 %349
  %v351 = vsel %vm34, %v331, 0.0
  %352 = vadd.xlane.f32.xlu0 %v351
  %v353 = vpop.xlane.xlu0 %352
  %v354 = vsel %vm40, %v332, 0.0
  %355 = vadd.xlane.f32.xlu0 %v354
  %v356 = vpop.xlane.xlu0 %355
  %v357 = vmul.f32 %v335, %v308
  %v358 = vmul.f32 %v338, %v308
  %v359 = vmul.f32 %v341, %v308
  %v360 = vmul.f32 %v344, %v308
  %v361 = vmul.f32 %v347, %v308
  %v362 = vmul.f32 %v350, %v308
  %v363 = vmul.f32 %v353, %v308
  %v364 = vmul.f32 %v356, %v308
  %v365 = vadd.f32 %v357, 1e-05
  %v366 = vadd.f32 %v358, 1e-05
  %v367 = vadd.f32 %v359, 1e-05
  %v368 = vadd.f32 %v360, 1e-05
  %v369 = vadd.f32 %v361, 1e-05
  %v370 = vadd.f32 %v362, 1e-05
  %v371 = vadd.f32 %v363, 1e-05
  %v372 = vadd.f32 %v364, 1e-05
  %v373 = vrsqrt.pop %v365
  %v374 = vrsqrt.pop %v366
  %v375 = vrsqrt.pop %v367
  %v376 = vrsqrt.pop %v368
  %v377 = vrsqrt.pop %v369
  %v378 = vrsqrt.pop %v370
  %v379 = vrsqrt.pop %v371
  %v380 = vrsqrt.pop %v372
  %v381 = vmul.f32 %v317, %v373
  %v382 = vmul.f32 %v318, %v374
  %v383 = vmul.f32 %v319, %v375
  %v384 = vmul.f32 %v320, %v376
  %v385 = vmul.f32 %v321, %v377
  %v386 = vmul.f32 %v322, %v378
  %v387 = vmul.f32 %v323, %v379
  %v388 = vmul.f32 %v324, %v380
  %v389 = vld [vmem:[%s5] sm:$0x1]
  %v391 = vlaneseq
  %v392 = vshrl.u32 %v391, 7
  %v393 = vsub.s32 0, %v392
  %v394 = vrot.slane %v389, %v393
  %v396 = vmul.f32 %v381, %v394
  %v397 = vmul.f32 %v382, %v394
  %v398 = vmul.f32 %v383, %v394
  %v399 = vmul.f32 %v384, %v394
  %v400 = vmul.f32 %v385, %v394
  %v401 = vmul.f32 %v386, %v394
  %v402 = vmul.f32 %v387, %v394
  %v403 = vmul.f32 %v388, %v394
  %v404 = vld [vmem:[%s6] sm:$0x1]
  %v406 = vlaneseq
  %v407 = vshrl.u32 %v406, 7
  %v408 = vsub.s32 0, %v407
  %v409 = vrot.slane %v404, %v408
  %v411 = vadd.f32 %v396, %v409
  %v412 = vadd.f32 %v397, %v409
  %v413 = vadd.f32 %v398, %v409
  %v414 = vadd.f32 %v399, %v409
  %v415 = vadd.f32 %v400, %v409
  %v416 = vadd.f32 %v401, %v409
  %v417 = vadd.f32 %v402, %v409
  %v418 = vadd.f32 %v403, %v409
  %v419 = vmul.f32 %v411, 2.0
  %v420 = vmul.f32 %v415, 2.0
  %v421 = vlaneseq
  %v422 = vshrl.u32 %v421, 7
  %v423 = vsub.s32 0, %v422
  %v424 = vrot.slane %v419, %v423
  %v425 = vlaneseq
  %v426 = vshrl.u32 %v425, 7
  %v427 = vsub.s32 0, %v426
  %v428 = vrot.slane %v420, %v427
  %v429 = vadd.f32 %v411, %v424
  %v430 = vadd.f32 %v412, %v424
  %v431 = vadd.f32 %v413, %v424
  %v432 = vadd.f32 %v414, %v424
  %v433 = vadd.f32 %v415, %v428
  %v434 = vadd.f32 %v416, %v428
  %v435 = vadd.f32 %v417, %v428
  %v436 = vadd.f32 %v418, %v428
  %v437 = vmul.f32 %v429, %v429
  %v438 = vmul.f32 %v430, %v430
  %v439 = vmul.f32 %v431, %v431
  %v440 = vmul.f32 %v432, %v432
  %v441 = vmul.f32 %v433, %v433
  %v442 = vmul.f32 %v434, %v434
  %v443 = vmul.f32 %v435, %v435
  %v444 = vmul.f32 %v436, %v436
  %vm445 = vcmask 261121
  %v446 = vsel %vm445, %v437, 0.0
  %447 = vadd.xlane.f32.xlu0 %v446
  %v448 = vpop.xlane.xlu0 %447
  %v449 = vsel %vm34, %v438, 0.0
  %450 = vadd.xlane.f32.xlu0 %v449
  %v451 = vpop.xlane.xlu0 %450
  %v452 = vsel %vm34, %v439, 0.0
  %453 = vadd.xlane.f32.xlu0 %v452
  %v454 = vpop.xlane.xlu0 %453
  %v455 = vsel %vm40, %v440, 0.0
  %456 = vadd.xlane.f32.xlu0 %v455
  %v457 = vpop.xlane.xlu0 %456
  %v458 = vsel %vm445, %v441, 0.0
  %459 = vadd.xlane.f32.xlu0 %v458
  %v460 = vpop.xlane.xlu0 %459
  %v461 = vsel %vm34, %v442, 0.0
  %462 = vadd.xlane.f32.xlu0 %v461
  %v463 = vpop.xlane.xlu0 %462
  %v464 = vsel %vm34, %v443, 0.0
  %465 = vadd.xlane.f32.xlu0 %v464
  %v466 = vpop.xlane.xlu0 %465
  %v467 = vsel %vm40, %v444, 0.0
  %468 = vadd.xlane.f32.xlu0 %v467
  %v469 = vpop.xlane.xlu0 %468
  %v470 = vrsqrt.pop %v448
  %v471 = vmul.f32 %v448, %v470
  %vm472 = vcmp.eq.f32.partialorder %v448, inf
  %v473 = vsel %vm472, %v448, %v471
  %vm474 = vcmp.eq.f32.partialorder %v448, 0.0
  %v475 = vand.u32 %v448, 2147483648
  %v476 = vsel %vm474, %v475, %v473
  %v477 = vrsqrt.pop %v451
  %v478 = vmul.f32 %v451, %v477
  %vm479 = vcmp.eq.f32.partialorder %v451, inf
  %v480 = vsel %vm479, %v451, %v478
  %vm481 = vcmp.eq.f32.partialorder %v451, 0.0
  %v482 = vand.u32 %v451, 2147483648
  %v483 = vsel %vm481, %v482, %v480
  %v484 = vrsqrt.pop %v454
  %v485 = vmul.f32 %v454, %v484
  %vm486 = vcmp.eq.f32.partialorder %v454, inf
  %v487 = vsel %vm486, %v454, %v485
  %vm488 = vcmp.eq.f32.partialorder %v454, 0.0
  %v489 = vand.u32 %v454, 2147483648
  %v490 = vsel %vm488, %v489, %v487
  %v491 = vrsqrt.pop %v457
  %v492 = vmul.f32 %v457, %v491
  %vm493 = vcmp.eq.f32.partialorder %v457, inf
  %v494 = vsel %vm493, %v457, %v492
  %vm495 = vcmp.eq.f32.partialorder %v457, 0.0
  %v496 = vand.u32 %v457, 2147483648
  %v497 = vsel %vm495, %v496, %v494
  %v498 = vrsqrt.pop %v460
  %v499 = vmul.f32 %v460, %v498
  %vm500 = vcmp.eq.f32.partialorder %v460, inf
  %v501 = vsel %vm500, %v460, %v499
  %vm502 = vcmp.eq.f32.partialorder %v460, 0.0
  %v503 = vand.u32 %v460, 2147483648
  %v504 = vsel %vm502, %v503, %v501
  %v505 = vrsqrt.pop %v463
  %v506 = vmul.f32 %v463, %v505
  %vm507 = vcmp.eq.f32.partialorder %v463, inf
  %v508 = vsel %vm507, %v463, %v506
  %vm509 = vcmp.eq.f32.partialorder %v463, 0.0
  %v510 = vand.u32 %v463, 2147483648
  %v511 = vsel %vm509, %v510, %v508
  %v512 = vrsqrt.pop %v466
  %v513 = vmul.f32 %v466, %v512
  %vm514 = vcmp.eq.f32.partialorder %v466, inf
  %v515 = vsel %vm514, %v466, %v513
  %vm516 = vcmp.eq.f32.partialorder %v466, 0.0
  %v517 = vand.u32 %v466, 2147483648
  %v518 = vsel %vm516, %v517, %v515
  %v519 = vrsqrt.pop %v469
  %v520 = vmul.f32 %v469, %v519
  %vm521 = vcmp.eq.f32.partialorder %v469, inf
  %v522 = vsel %vm521, %v469, %v520
  %vm523 = vcmp.eq.f32.partialorder %v469, 0.0
  %v524 = vand.u32 %v469, 2147483648
  %v525 = vsel %vm523, %v524, %v522
  %v526 = vmax.f32 %v476, 1e-12
  %v527 = vmax.f32 %v483, 1e-12
  %v528 = vmax.f32 %v490, 1e-12
  %v529 = vmax.f32 %v497, 1e-12
  %v530 = vmax.f32 %v504, 1e-12
  %v531 = vmax.f32 %v511, 1e-12
  %v532 = vmax.f32 %v518, 1e-12
  %v533 = vmax.f32 %v525, 1e-12
  %v534 = vrcp.pop %v526
  %v535 = vmul.f32 %v429, %v534
  %v536 = vrcp.pop %v527
  %v537 = vmul.f32 %v430, %v536
  %v538 = vrcp.pop %v528
  %v539 = vmul.f32 %v431, %v538
  %v540 = vrcp.pop %v529
  %v541 = vmul.f32 %v432, %v540
  %v542 = vrcp.pop %v530
  %v543 = vmul.f32 %v433, %v542
  %v544 = vrcp.pop %v531
  %v545 = vmul.f32 %v434, %v544
  %v546 = vrcp.pop %v532
  %v547 = vmul.f32 %v435, %v546
  %v548 = vrcp.pop %v533
  %v549 = vmul.f32 %v436, %v548
  %v550 = vsel %vm445, %v535, 0.0
  %551 = vadd.xlane.f32.xlu0 %v550
  %v552 = vpop.xlane.xlu0 %551
  %v553 = vsel %vm34, %v537, 0.0
  %554 = vadd.xlane.f32.xlu0 %v553
  %v555 = vpop.xlane.xlu0 %554
  %v556 = vsel %vm34, %v539, 0.0
  %557 = vadd.xlane.f32.xlu0 %v556
  %v558 = vpop.xlane.xlu0 %557
  %v559 = vsel %vm40, %v541, 0.0
  %560 = vadd.xlane.f32.xlu0 %v559
  %v561 = vpop.xlane.xlu0 %560
  %v562 = vsel %vm445, %v543, 0.0
  %563 = vadd.xlane.f32.xlu0 %v562
  %v564 = vpop.xlane.xlu0 %563
  %v565 = vsel %vm34, %v545, 0.0
  %566 = vadd.xlane.f32.xlu0 %v565
  %v567 = vpop.xlane.xlu0 %566
  %v568 = vsel %vm34, %v547, 0.0
  %569 = vadd.xlane.f32.xlu0 %v568
  %v570 = vpop.xlane.xlu0 %569
  %v571 = vsel %vm40, %v549, 0.0
  %572 = vadd.xlane.f32.xlu0 %v571
  %v573 = vpop.xlane.xlu0 %572
  %v574 = vmul.f32 %v552, %v308
  %v575 = vmul.f32 %v555, %v308
  %v576 = vmul.f32 %v558, %v308
  %v577 = vmul.f32 %v561, %v308
  %v578 = vmul.f32 %v564, %v308
  %v579 = vmul.f32 %v567, %v308
  %v580 = vmul.f32 %v570, %v308
  %v581 = vmul.f32 %v573, %v308
  %v582 = vsub.f32 %v535, %v574
  %v583 = vsub.f32 %v537, %v575
  %v584 = vsub.f32 %v539, %v576
  %v585 = vsub.f32 %v541, %v577
  %v586 = vsub.f32 %v543, %v578
  %v587 = vsub.f32 %v545, %v579
  %v588 = vsub.f32 %v547, %v580
  %v589 = vsub.f32 %v549, %v581
  %v590 = vpack.c.bf16 %v583, %v582
  %v591 = vpack.c.bf16 %v585, %v584
  %v592 = vpack.c.bf16 %v587, %v586
  %v593 = vpack.c.bf16 %v589, %v588
  %v598 = vunpack.c.l.b16 %v590
  %v599 = vunpack.c.h.b16 %v590
  %v600 = vunpack.c.l.b16 %v591
  %v601 = vunpack.c.h.b16 %v591
  %v602 = vunpack.c.l.b16 %v592
  %v603 = vunpack.c.h.b16 %v592
  %v604 = vunpack.c.l.b16 %v593
  %v605 = vunpack.c.h.b16 %v593
  %v606 = vpack.c.b16 %v598, %v598
  %v607 = vpack.c.b16 %v599, %v599
  %v608 = vpack.c.b16 %v600, %v600
  %v609 = vpack.c.b16 %v601, %v601
  %v610 = vpack.c.b16 %v602, %v602
  %v611 = vpack.c.b16 %v603, %v603
  %v612 = vpack.c.b16 %v604, %v604
  %v613 = vpack.c.b16 %v605, %v605
  %vm614 = vsmask.f32 3328
  %vm615 = vsmask.f32 7440
  %vm616 = vmor %vm614, %vm615
  %v618 = vshrl.u32 %v606, 16
  %v620 = vrot.slane %v618, 4
  %v621 = vshll.u32 %v606, 16
  %v623 = vrot.slane %v621, 5
  %v624 = vor.u32 %v620, %v623
  %v625 = vrot.slane %v624, 4
  %v627 = vshll.u32 %v607, 16
  %v629 = vrot.slane %v627, 5
  %v630 = vsel %vm616, %v625, %v629
  %v631 = vshrl.u32 %v607, 16
  %v633 = vrot.slane %v631, 4
  %v634 = vor.u32 %v633, %v629
  %v635 = vrot.slane %v634, 4
  %v637 = vshll.u32 %v608, 16
  %v639 = vrot.slane %v637, 5
  %v640 = vsel %vm616, %v635, %v639
  %v641 = vshrl.u32 %v608, 16
  %v643 = vrot.slane %v641, 4
  %v644 = vor.u32 %v643, %v639
  %v645 = vrot.slane %v644, 4
  %v647 = vshll.u32 %v609, 16
  %v649 = vrot.slane %v647, 5
  %v650 = vsel %vm616, %v645, %v649
  %v651 = vshrl.u32 %v609, 16
  %v653 = vrot.slane %v651, 4
  %v654 = vrot.slane %v653, 4
  %v656 = vshrl.u32 %v610, 16
  %v658 = vrot.slane %v656, 4
  %v659 = vshll.u32 %v610, 16
  %v661 = vrot.slane %v659, 5
  %v662 = vor.u32 %v658, %v661
  %v663 = vrot.slane %v662, 4
  %v665 = vshll.u32 %v611, 16
  %v667 = vrot.slane %v665, 5
  %v668 = vsel %vm616, %v663, %v667
  %v669 = vshrl.u32 %v611, 16
  %v671 = vrot.slane %v669, 4
  %v672 = vor.u32 %v671, %v667
  %v673 = vrot.slane %v672, 4
  %v675 = vshll.u32 %v612, 16
  %v677 = vrot.slane %v675, 5
  %v678 = vsel %vm616, %v673, %v677
  %v679 = vshrl.u32 %v612, 16
  %v681 = vrot.slane %v679, 4
  %v682 = vor.u32 %v681, %v677
  %v683 = vrot.slane %v682, 4
  %v685 = vshll.u32 %v613, 16
  %v687 = vrot.slane %v685, 5
  %v688 = vsel %vm616, %v683, %v687
  %v689 = vshrl.u32 %v613, 16
  %v691 = vrot.slane %v689, 4
  %v692 = vrot.slane %v691, 4
  %vm701 = vcmask 257024
  %702 = vst.msk [vmem:[%s7] sm:$0xf] %vm701, %v630
  %703 = vst.msk [vmem:[%s7 + $0x4] sm:$0xf] %vm701, %v640
  %704 = vst.msk [vmem:[%s7 + $0x8] sm:$0xf] %vm701, %v650
  %vm705 = vcmask 253952
  %vm706 = vsmask.f32 256
  %vm707 = vmand %vm705, %vm706
  %v708 = vld [vmem:[%s7 + $0xc] sm:$0x1]
  %v709 = vsel %vm707, %v654, %v708
  %710 = vst [vmem:[%s7 + $0xc] sm:$0x1] %v709
  %711 = vst.msk [vmem:[%s7 + $0x10] sm:$0xf] %vm701, %v668
  %712 = vst.msk [vmem:[%s7 + $0x14] sm:$0xf] %vm701, %v678
  %713 = vst.msk [vmem:[%s7 + $0x18] sm:$0xf] %vm701, %v688
  %v714 = vld [vmem:[%s7 + $0x1c] sm:$0x1]
  %v715 = vsel %vm707, %v692, %v714
  %716 = vst [vmem:[%s7 + $0x1c] sm:$0x1] %v715
  // Predicated region
  $region30: #{tpu_custom_call.1} parent=0 // pred_check
    _
  $region31: #{tpu_custom_call.1} parent=0 // pred_check_branch
    %718 = sbr.rel (0) target = $region33
  $region32: #{tpu_custom_call.1} parent=0 // pred_region
    _
  $region33: #{tpu_custom_call.1} parent=0 // pred_fallthru
    _
  // Predicated region
  $region34: #{tpu_custom_call.1} parent=0 // pred_check
    _
  $region35: #{tpu_custom_call.1} parent=0 // pred_check_branch
    %720 = sbr.rel (0) target = $region37
  $region36: #{tpu_custom_call.1} parent=0 // pred_region
    _
  $region37: #{tpu_custom_call.1} parent=0 // pred_fallthru
    _

</llo_original>
